<compile_context>
chip_gen: v6e
topology: v6e:2x2x1
jax: 0.10.0
libtpu: 0.0.40
codegen_flags: <defaults>
</compile_context>

<pallas_src>
import functools

import jax
import jax.numpy as jnp
from jax.experimental import pallas as pl
from jax.experimental.pallas import tpu as pltpu

_LANE_CANDIDATES = (1024, 512, 256, 128)   # widest lane-dense width preferred
_TARGET_BLOCK_BYTES = 1 << 20              # ~1 MiB per input block (double-buffered)
_VMEM_LIMIT_BYTES = 32 * 1024 * 1024


def _pick_lanes(n):
    """Widest lane width that divides n (no padding copy needed); else 128."""
    for lanes in _LANE_CANDIDATES:
        if n % lanes == 0:
            return lanes
    return 128


def _pick_block_rows(rows, lanes, itemsize):
    """Block rows targeting ~1 MiB per block; (8,128)-aligned (>=16 covers bf16)."""
    cap = _TARGET_BLOCK_BYTES // (lanes * itemsize)
    cap = max(8, cap - (cap % 8))
    return min(rows, cap)


def _flatten_lane_dense(arr):
    """(rows, lanes) lane-dense 2D view; pads only when no lane width divides n."""
    n = arr.size
    lanes = _pick_lanes(n)
    pad = (-n) % lanes
    flat = arr.reshape(-1)
    if pad:
        flat = jnp.pad(flat, (0, pad))
    return flat.reshape(-1, lanes), n, lanes, pad


# --------------------------------------------------------------------------- #
# Kernels
# --------------------------------------------------------------------------- #
def _add_kernel(x_ref, adv_ref, y_ref):
    """Reduction-free path: y = x + adv (pure mem-bound, 3 HBM streams)."""
    y_ref[...] = x_ref[...] + adv_ref[...]


def _add_std_kernel(x_ref, adv_ref, shift_ref, y_ref, s_ref, sq_ref,
                    *, block_rows, lanes, total_rows, tail_lanes):
    """Fused y = x + adv plus per-block partial sums of (x-c) and (x-c)^2."""
    x = x_ref[...]
    y_ref[...] = (x + adv_ref[...]).astype(y_ref.dtype)

    c = shift_ref[0]                            # scalar shift (~mean) from SMEM
    xs = x.astype(jnp.float32) - c

    # Static (trace-time) decision: mask only if the last row block is partial
    # and/or the last row has a padded lane tail.
    needs_row_mask = (total_rows % block_rows) != 0
    needs_lane_mask = tail_lanes != lanes
    if needs_row_mask or needs_lane_mask:
        row0 = pl.program_id(0) * block_rows
        gr = row0 + jax.lax.broadcasted_iota(jnp.int32, (block_rows, lanes), 0)
        if needs_lane_mask:
            li = jax.lax.broadcasted_iota(jnp.int32, (block_rows, lanes), 1)
            mask = (gr < total_rows - 1) | ((gr == total_rows - 1) & (li < tail_lanes))
        else:
            mask = gr < total_rows
        xs = jnp.where(mask, xs, 0.0)

    # Sublane reduce (XLU slot, idle in this mem-bound kernel) to a tiny
    # (1, lanes) partial per block -> negligible extra writeback.
    s_ref[0] = jnp.sum(xs, axis=0, keepdims=True)
    sq_ref[0] = jnp.sum(xs * xs, axis=0, keepdims=True)


# --------------------------------------------------------------------------- #
# Jitted wrappers
# --------------------------------------------------------------------------- #
@jax.jit
def _advnoise_add(x, adv):
    """y = x + adv via a tiled Pallas kernel (no reduction)."""
    x2d, n, lanes, pad = _flatten_lane_dense(x)
    adv2d, _, _, _ = _flatten_lane_dense(adv)
    rows = x2d.shape[0]
    br = _pick_block_rows(rows, lanes, x.dtype.itemsize)
    nblocks = pl.cdiv(rows, br)

    y2d = pl.pallas_call(
        _add_kernel,
        out_shape=jax.ShapeDtypeStruct((rows, lanes), x.dtype),
        grid_spec=pltpu.PrefetchScalarGridSpec(
            num_scalar_prefetch=0,
            grid=(nblocks,),
            in_specs=[
                pl.BlockSpec((br, lanes), lambda i: (i, 0)),
                pl.BlockSpec((br, lanes), lambda i: (i, 0)),
            ],
            out_specs=pl.BlockSpec((br, lanes), lambda i: (i, 0)),
        ),
        compiler_params=pltpu.CompilerParams(
            dimension_semantics=("parallel",),
            vmem_limit_bytes=_VMEM_LIMIT_BYTES,
        ),
    )(x2d, adv2d)

    yf = y2d.reshape(-1)
    if pad:
        yf = yf[:n]
    return yf.reshape(x.shape)


@jax.jit
def _advnoise_add_std(x, adv):
    """Fused y = x + adv and unbiased std(x) (matching torch.Tensor.std())."""
    x2d, n, lanes, pad = _flatten_lane_dense(x)
    adv2d, _, _, _ = _flatten_lane_dense(adv)
    rows = x2d.shape[0]
    br = _pick_block_rows(rows, lanes, x.dtype.itemsize)
    nblocks = pl.cdiv(rows, br)
    tail = n - (rows - 1) * lanes          # valid lanes in the last row (1..lanes)

    # Shift by the first element: std is shift-invariant and this tames
    # catastrophic cancellation in the sum-of-squares formula for large means.
    shift = x.reshape(-1)[:1].astype(jnp.float32)

    kernel = functools.partial(
        _add_std_kernel,
        block_rows=br, lanes=lanes, total_rows=rows, tail_lanes=tail)

    y2d, s_parts, q_parts = pl.pallas_call(
        kernel,
        out_shape=(
            jax.ShapeDtypeStruct((rows, lanes), x.dtype),
            jax.ShapeDtypeStruct((nblocks, 1, lanes), jnp.float32),
            jax.ShapeDtypeStruct((nblocks, 1, lanes), jnp.float32),
        ),
        grid_spec=pltpu.PrefetchScalarGridSpec(
            num_scalar_prefetch=0,
            grid=(nblocks,),
            in_specs=[
                pl.BlockSpec((br, lanes), lambda i: (i, 0)),
                pl.BlockSpec((br, lanes), lambda i: (i, 0)),
                pl.BlockSpec(memory_space=pltpu.MemorySpace.SMEM),   # scalar shift
            ],
            out_specs=[
                pl.BlockSpec((br, lanes), lambda i: (i, 0)),
                pl.BlockSpec((1, 1, lanes), lambda i: (i, 0, 0)),    # per-block partials
                pl.BlockSpec((1, 1, lanes), lambda i: (i, 0, 0)),
            ],
        ),
        compiler_params=pltpu.CompilerParams(
            dimension_semantics=("parallel",),
            vmem_limit_bytes=_VMEM_LIMIT_BYTES,
        ),
    )(x2d, adv2d, shift)

    yf = y2d.reshape(-1)
    if pad:
        yf = yf[:n]
    y = yf.reshape(x.shape)

    # Tiny final reduce + unbiased (ddof=1) variance, all on device.
    s = jnp.sum(s_parts, dtype=jnp.float32)
    q = jnp.sum(q_parts, dtype=jnp.float32)
    n_f = jnp.float32(n)
    var = (q - s * s / n_f) / (n_f - 1.0)
    std = jnp.sqrt(jnp.maximum(var, 0.0))
    return y, std


# --------------------------------------------------------------------------- #
# Module
# --------------------------------------------------------------------------- #
class AdvNoise:
    """JAX/Pallas port of ANL's AdvNoise module (forward pass only)."""

    def __init__(self, eps):
        self.eps = float(eps)
        self.adv = None
        self.input_std = 0.0        # becomes a device scalar after the first 'stay' step
        self.dim = None
        self.status = "clean"
        self.training = True

    def extra_repr(self):
        return "eps=%f" % self.eps

    def set_clean(self):
        self.status = "clean"

    def set_stay(self):
        self.status = "stay"

    def zero_adv(self):
        if self.adv is not None:
            self.adv = jnp.zeros_like(self.adv)

    # TODO(synk): update_adv / cal_r depend on an autograd backward hook (grad
    # w.r.t. adv) and a stateful RNG draw at backward time; only the forward
    # pass is ported here.

    def forward(self, x):
        if self.eps == 0.0:
            return x
        if self.adv is None:
            self.adv = jnp.zeros_like(x)
            self.dim = [1 if i != 0 else -1 for i in range(len(self.adv.shape))]
        if (not self.training) or (x.shape != self.adv.shape):
            return x
        if self.status == "clean":
            # adv is (re)zeroed, so x + adv == x exactly: skip the kernel and
            # save 3 full HBM passes of no-op work.
            self.zero_adv()
            return x
        if self.status == "stay":
            y, std = _advnoise_add_std(x, self.adv)
            # EMA kept on device: no .item()-style host sync per training step.
            self.input_std = 0.9 * self.input_std + 0.1 * std
            return y
        # Any other training status: plain x + adv, no reduction needed.
        return _advnoise_add(x, self.adv)

    __call__ = forward


# --------------------------------------------------------------------------- #
# Self-test
# --------------------------------------------------------------------------- #
if __name__ == "__main__":
    key = jax.random.PRNGKey(0)
    kx, ka, kb, kc, kd = jax.random.split(key, 5)

    # NCHW input: batch=2, channels=4, spatial=16x16 (2048 elems -> 1024-lane slab).
    x = jax.random.normal(kx, (2, 4, 16, 16), dtype=jnp.float32)

    mod = AdvNoise(eps=0.05)
    mod.training = True

    # 1) clean pass: adv created & zeroed -> output == x, kernel skipped.
    y_clean = jax.block_until_ready(mod(x))
    assert y_clean.shape == x.shape
    assert jnp.allclose(y_clean, x)

    # 2) 'stay' pass with a (deterministically simulated) non-zero adv buffer,
    #    as it would look after a backward-hook update in the original module.
    mod.set_stay()
    mod.adv = 0.01 * jax.random.normal(ka, x.shape, dtype=jnp.float32)
    y_stay = jax.block_until_ready(mod(x))

    ref_y = x + mod.adv
    ref_std = 0.1 * float(jnp.std(x, ddof=1))     # previous input_std was 0.0
    assert jnp.allclose(y_stay, ref_y, atol=1e-5)
    assert abs(float(mod.input_std) - ref_std) < 1e-4

    # 3) reduction-free add-only kernel (used for non-clean / non-stay statuses).
    y_add = jax.block_until_ready(_advnoise_add(x, mod.adv))
    assert jnp.allclose(y_add, ref_y, atol=1e-6)

    # 4) ragged element count (1155): exercises the padded / lane-masked tail.
    x2 = jax.random.normal(kb, (3, 5, 7, 11), dtype=jnp.float32)
    mod2 = AdvNoise(eps=0.05)
    mod2.adv = 0.01 * jnp.ones_like(x2)
    mod2.set_stay()
    y2 = jax.block_until_ready(mod2(x2))
    assert jnp.allclose(y2, x2 + mod2.adv, atol=1e-5)
    ref_std2 = 0.1 * float(jnp.std(x2, ddof=1))
    assert abs(float(mod2.input_std) - ref_std2) < 1e-4

    # 5) rows not divisible by the block rows (300 rows of 1024 lanes):
    #    exercises the partial last row-block + row mask path.
    x3 = jax.random.normal(kc, (2, 4, 192, 200), dtype=jnp.float32)   # 307200 elems
    adv3 = 0.001 * jax.random.normal(kd, x3.shape, dtype=jnp.float32)
    y3, std3 = _advnoise_add_std(x3, adv3)
    y3 = jax.block_until_ready(y3)
    assert jnp.allclose(y3, x3 + adv3, atol=1e-5)
    assert abs(float(std3) - float(jnp.std(x3, ddof=1))) < 1e-3

    print("KERNEL_OK")
</pallas_src>

<mosaic_0001>
module attributes {stable_mosaic.version = 11 : i64} {
  func.func @_add_std_kernel(%arg0: i32, %arg1: memref<2x1024xf32, #tpu.memory_space<vmem>>, %arg2: memref<2x1024xf32, #tpu.memory_space<vmem>>, %arg3: memref<1xf32, #tpu.memory_space<smem>>, %arg4: memref<2x1024xf32, #tpu.memory_space<vmem>>, %arg5: memref<1x1x1024xf32, #tpu.memory_space<vmem>>, %arg6: memref<1x1x1024xf32, #tpu.memory_space<vmem>>) attributes {dimension_semantics = [#tpu.dimension_semantics<parallel>], iteration_bounds = array<i64: 1>, scalar_prefetch = 0 : i64, scratch_operands = 0 : i64, tpu.core_type = #tpu.core_type<tc>, window_params = [{transform_indices = @transform_0, window_bounds = array<i64: 2, 1024>}, {transform_indices = @transform_1, window_bounds = array<i64: 2, 1024>}, {transform_indices = @transform_2, window_bounds = array<i64: 1>}, {transform_indices = @transform_3, window_bounds = array<i64: 2, 1024>}, {transform_indices = @transform_4, window_bounds = array<i64: 1, 1, 1024>}, {transform_indices = @transform_5, window_bounds = array<i64: 1, 1, 1024>}]} {
    %c0 = arith.constant 0 : index
    %c0_0 = arith.constant 0 : index
    %0 = vector.load %arg1[%c0, %c0_0] : memref<2x1024xf32, #tpu.memory_space<vmem>>, vector<2x1024xf32>
    %c0_1 = arith.constant 0 : index
    %c0_2 = arith.constant 0 : index
    %1 = vector.load %arg2[%c0_1, %c0_2] : memref<2x1024xf32, #tpu.memory_space<vmem>>, vector<2x1024xf32>
    %2 = arith.addf %0, %1 : vector<2x1024xf32>
    %c0_3 = arith.constant 0 : index
    %c0_4 = arith.constant 0 : index
    %3 = vector.load %arg4[%c0_3, %c0_4] : memref<2x1024xf32, #tpu.memory_space<vmem>>, vector<2x1024xf32>
    tpu.vector_store %arg4[%c0_3, %c0_4], %2 {strides = array<i32>} : memref<2x1024xf32, #tpu.memory_space<vmem>>, vector<2x1024xf32>,
    %c0_5 = arith.constant 0 : index
    %4 = memref.load %arg3[%c0_5] : memref<1xf32, #tpu.memory_space<smem>>
    %5 = vector.broadcast %4 : f32 to vector<2x1024xf32>
    %6 = arith.subf %0, %5 : vector<2x1024xf32>
    %cst = arith.constant dense<0.000000e+00> : vector<1024xf32>
    %7 = vector.multi_reduction <add>, %6, %cst [0] : vector<2x1024xf32> to vector<1024xf32>
    %8 = vector.shape_cast %7 : vector<1024xf32> to vector<1x1024xf32>
    %c0_6 = arith.constant 0 : index
    %c0_7 = arith.constant 0 : index
    %c0_8 = arith.constant 0 : index
    %9 = vector.load %arg5[%c0_6, %c0_7, %c0_8] : memref<1x1x1024xf32, #tpu.memory_space<vmem>>, vector<1x1x1024xf32>
    %10 = vector.shape_cast %9 : vector<1x1x1024xf32> to vector<1x1024xf32>
    %11 = vector.shape_cast %8 : vector<1x1024xf32> to vector<1x1x1024xf32>
    tpu.vector_store %arg5[%c0_6, %c0_7, %c0_8], %11 {strides = array<i32>} : memref<1x1x1024xf32, #tpu.memory_space<vmem>>, vector<1x1x1024xf32>,
    %12 = arith.mulf %6, %6 : vector<2x1024xf32>
    %cst_9 = arith.constant dense<0.000000e+00> : vector<1024xf32>
    %13 = vector.multi_reduction <add>, %12, %cst_9 [0] : vector<2x1024xf32> to vector<1024xf32>
    %14 = vector.shape_cast %13 : vector<1024xf32> to vector<1x1024xf32>
    %c0_10 = arith.constant 0 : index
    %c0_11 = arith.constant 0 : index
    %c0_12 = arith.constant 0 : index
    %15 = vector.load %arg6[%c0_10, %c0_11, %c0_12] : memref<1x1x1024xf32, #tpu.memory_space<vmem>>, vector<1x1x1024xf32>
    %16 = vector.shape_cast %15 : vector<1x1x1024xf32> to vector<1x1024xf32>
    %17 = vector.shape_cast %14 : vector<1x1024xf32> to vector<1x1x1024xf32>
    tpu.vector_store %arg6[%c0_10, %c0_11, %c0_12], %17 {strides = array<i32>} : memref<1x1x1024xf32, #tpu.memory_space<vmem>>, vector<1x1x1024xf32>,
    return
  }
  func.func @transform_0(%arg0: i32) -> (i32, i32) {
    %c0_i32 = arith.constant 0 : i32
    %c0_i32_0 = arith.constant 0 : i32
    return %arg0, %c0_i32 : i32, i32
  }
  func.func @transform_1(%arg0: i32) -> (i32, i32) {
    %c0_i32 = arith.constant 0 : i32
    %c0_i32_0 = arith.constant 0 : i32
    return %arg0, %c0_i32 : i32, i32
  }
  func.func @transform_2(%arg0: i32) -> i32 {
    %c0_i32 = arith.constant 0 : i32
    %c0_i32_0 = arith.constant 0 : i32
    return %c0_i32 : i32
  }
  func.func @transform_3(%arg0: i32) -> (i32, i32) {
    %c0_i32 = arith.constant 0 : i32
    %c0_i32_0 = arith.constant 0 : i32
    return %arg0, %c0_i32 : i32, i32
  }
  func.func @transform_4(%arg0: i32) -> (i32, i32, i32) {
    %c0_i32 = arith.constant 0 : i32
    %c0_i32_0 = arith.constant 0 : i32
    %c0_i32_1 = arith.constant 0 : i32
    return %arg0, %c0_i32, %c0_i32_0 : i32, i32, i32
  }
  func.func @transform_5(%arg0: i32) -> (i32, i32, i32) {
    %c0_i32 = arith.constant 0 : i32
    %c0_i32_0 = arith.constant 0 : i32
    %c0_i32_1 = arith.constant 0 : i32
    return %arg0, %c0_i32, %c0_i32_0 : i32, i32, i32
  }
}

</mosaic_0001>

<llo_original>
// kernel: _advnoise_add_std.1
$region0: #{_advnoise_add_std.1}
  #allocation0 [shape = 'u32[]', space=smem, size = 0x4, offset = 0x4, fixed_abs, tag = 'smem constant byte address 0x4 - core index']
  #allocation1 [shape = 'u32[144,128]{1,0:T(1,128)}', space=vmem, size = 0x12000, scoped, tag = 'internal scratch']
  #allocation2 [shape = 'f32[1]{0:T(128)S(6)}', space=smem, size = 0x200, scoped, tag = 'scoped memory for _advnoise_add_std.1']
  %s0 = inlined_call_operand.vmem [shape: f32[2,1024], index: 0, kind: input, shape index: {}]
  %s1 = inlined_call_operand.vmem [shape: f32[2,1024], index: 1, kind: input, shape index: {}]
  %s2 = inlined_call_operand.<no memory space> [shape: f32[1], index: 2, kind: input, shape index: {}]
  %s3 = inlined_call_operand.vmem [shape: f32[2,1024], index: 3, kind: output, shape index: {0}]
  %s4 = inlined_call_operand.vmem [shape: f32[1,1,1024], index: 4, kind: output, shape index: {1}]
  %s5 = inlined_call_operand.vmem [shape: f32[1,1,1024], index: 5, kind: output, shape index: {2}]
  %6 = xla_tuple %s3, %s4, %s5
  %s7 = sld [smem:[#allocation0]]
  $region38: #{_advnoise_add_std.1} parent=0
    _
  %s9 = ssub.s32 1, %s7
  %s10 = scalar_select 0, %s9, %s7
  %11 = sst [smem:[#allocation2]] %s2
  // Predicated region
  $region2: #{_advnoise_add_std.1} parent=0 // pred_check
    _
  $region3: #{_advnoise_add_std.1} parent=0 // pred_check_branch
    %13 = sbr.rel (0) target = $region5
  $region4: #{_advnoise_add_std.1} parent=0 // pred_region
    _
  $region5: #{_advnoise_add_std.1} parent=0 // pred_fallthru
    _
  // Predicated region
  $region6: #{_advnoise_add_std.1} parent=0 // pred_check
    _
  $region7: #{_advnoise_add_std.1} parent=0 // pred_check_branch
    %15 = sbr.rel (0) target = $region9
  $region8: #{_advnoise_add_std.1} parent=0 // pred_region
    _
  $region9: #{_advnoise_add_std.1} parent=0 // pred_fallthru
    _
  // Predicated region
  $region10: #{_advnoise_add_std.1} parent=0 // pred_check
    _
  $region11: #{_advnoise_add_std.1} parent=0 // pred_check_branch
    %17 = sbr.rel (0) target = $region13
  $region12: #{_advnoise_add_std.1} parent=0 // pred_region
    _
  $region13: #{_advnoise_add_std.1} parent=0 // pred_fallthru
    _
  %v18 = vld [vmem:[%s0] sm:$0xff]
  %v19 = vld [vmem:[%s0 + $0x8] sm:$0xff]
  %v20 = vld [vmem:[%s1] sm:$0xff]
  %v21 = vld [vmem:[%s1 + $0x8] sm:$0xff]
  %v22 = vadd.f32 %v18, %v20
  %v23 = vadd.f32 %v19, %v21
  %24 = vst [vmem:[%s3] sm:$0xff] %v22
  %25 = vst [vmem:[%s3 + $0x8] sm:$0xff] %v23
  %s26 = sld [smem:[#allocation2]]
  %v27 = vstv %s26
  %v28 = vsub.f32 %v18, %v27
  %v29 = vsub.f32 %v19, %v27
  %v32 = vcombine.high %v28, %v28
  %v34 = vunpack.c.l.s4 1983009808
  %v35 = vunpack.c.0.s8 %v34
  %v36 = vlaneseq
  %v37 = vshrl.u32 %v36, 7
  %v38 = vsub.s32 %v35, %v37
  %v39 = vrot.slane %v28, %v38
  %v41 = vunpack.c.l.s4 1983009808
  %v42 = vunpack.c.0.s8 %v41
  %v43 = vlaneseq
  %v44 = vshrl.u32 %v43, 7
  %v45 = vsub.s32 %v42, %v44
  %v46 = vrot.slane %v32, %v45
  %v47 = vcombine.high %v39, %v39
  %v48 = vcombine.high %v46, %v46
  %v49 = vcombine.high %v29, %v29
  %v51 = vunpack.c.l.s4 1983009808
  %v52 = vunpack.c.0.s8 %v51
  %v53 = vlaneseq
  %v54 = vshrl.u32 %v53, 7
  %v55 = vsub.s32 %v52, %v54
  %v56 = vrot.slane %v29, %v55
  %v58 = vunpack.c.l.s4 1983009808
  %v59 = vunpack.c.0.s8 %v58
  %v60 = vlaneseq
  %v61 = vshrl.u32 %v60, 7
  %v62 = vsub.s32 %v59, %v61
  %v63 = vrot.slane %v49, %v62
  %v64 = vcombine.high %v56, %v56
  %v65 = vcombine.high %v63, %v63
  %vm74 = vcmask 1041408
  %v75 = vsel %vm74, %v39, 0.0
  %v76 = vrot.slane %v75, 4
  %v77 = vadd.f32 %v75, %v76
  %v78 = vrot.slane %v77, 2
  %v79 = vadd.f32 %v77, %v78
  %v80 = vrot.slane %v79, 1
  %v81 = vadd.f32 %v79, %v80
  %v82 = vsel %vm74, %v47, 0.0
  %v83 = vrot.slane %v82, 4
  %v84 = vadd.f32 %v82, %v83
  %v85 = vrot.slane %v84, 2
  %v86 = vadd.f32 %v84, %v85
  %v87 = vrot.slane %v86, 1
  %v88 = vadd.f32 %v86, %v87
  %v89 = vsel %vm74, %v46, 0.0
  %v90 = vrot.slane %v89, 4
  %v91 = vadd.f32 %v89, %v90
  %v92 = vrot.slane %v91, 2
  %v93 = vadd.f32 %v91, %v92
  %v94 = vrot.slane %v93, 1
  %v95 = vadd.f32 %v93, %v94
  %v96 = vsel %vm74, %v48, 0.0
  %v97 = vrot.slane %v96, 4
  %v98 = vadd.f32 %v96, %v97
  %v99 = vrot.slane %v98, 2
  %v100 = vadd.f32 %v98, %v99
  %v101 = vrot.slane %v100, 1
  %v102 = vadd.f32 %v100, %v101
  %v103 = vsel %vm74, %v56, 0.0
  %v104 = vrot.slane %v103, 4
  %v105 = vadd.f32 %v103, %v104
  %v106 = vrot.slane %v105, 2
  %v107 = vadd.f32 %v105, %v106
  %v108 = vrot.slane %v107, 1
  %v109 = vadd.f32 %v107, %v108
  %v110 = vsel %vm74, %v64, 0.0
  %v111 = vrot.slane %v110, 4
  %v112 = vadd.f32 %v110, %v111
  %v113 = vrot.slane %v112, 2
  %v114 = vadd.f32 %v112, %v113
  %v115 = vrot.slane %v114, 1
  %v116 = vadd.f32 %v114, %v115
  %v117 = vsel %vm74, %v63, 0.0
  %v118 = vrot.slane %v117, 4
  %v119 = vadd.f32 %v117, %v118
  %v120 = vrot.slane %v119, 2
  %v121 = vadd.f32 %v119, %v120
  %v122 = vrot.slane %v121, 1
  %v123 = vadd.f32 %v121, %v122
  %v124 = vsel %vm74, %v65, 0.0
  %v125 = vrot.slane %v124, 4
  %v126 = vadd.f32 %v124, %v125
  %v127 = vrot.slane %v126, 2
  %v128 = vadd.f32 %v126, %v127
  %v129 = vrot.slane %v128, 1
  %v130 = vadd.f32 %v128, %v129
  %v139 = vcombine.low %v81, %v88
  %v140 = vcombine.low %v95, %v102
  %v141 = vcombine.low %v109, %v116
  %v142 = vcombine.low %v123, %v130
  %v144 = vunpack.c.l.s4 1966171168
  %v145 = vunpack.c.0.s8 %v144
  %v146 = vlaneseq
  %v147 = vshrl.u32 %v146, 7
  %v148 = vsub.s32 %v145, %v147
  %v149 = vrot.slane %v139, %v148
  %v151 = vunpack.c.l.s4 1966171168
  %v152 = vunpack.c.0.s8 %v151
  %v153 = vlaneseq
  %v154 = vshrl.u32 %v153, 7
  %v155 = vsub.s32 %v152, %v154
  %v156 = vrot.slane %v140, %v155
  %v158 = vunpack.c.l.s4 1966171168
  %v159 = vunpack.c.0.s8 %v158
  %v160 = vlaneseq
  %v161 = vshrl.u32 %v160, 7
  %v162 = vsub.s32 %v159, %v161
  %v163 = vrot.slane %v141, %v162
  %v165 = vunpack.c.l.s4 1966171168
  %v166 = vunpack.c.0.s8 %v165
  %v167 = vlaneseq
  %v168 = vshrl.u32 %v167, 7
  %v169 = vsub.s32 %v166, %v168
  %v170 = vrot.slane %v142, %v169
  %v171 = vcombine.low %v149, %v156
  %v172 = vcombine.low %v163, %v170
  %v174 = vunpack.c.l.s4 1966171168
  %v175 = vunpack.c.0.s8 %v174
  %v176 = vlaneseq
  %v177 = vshrl.u32 %v176, 7
  %v178 = vsub.s32 %v175, %v177
  %v179 = vrot.slane %v171, %v178
  %v181 = vunpack.c.l.s4 1966171168
  %v182 = vunpack.c.0.s8 %v181
  %v183 = vlaneseq
  %v184 = vshrl.u32 %v183, 7
  %v185 = vsub.s32 %v182, %v184
  %v186 = vrot.slane %v172, %v185
  %v187 = vcombine.low %v179, %v186
  %189 = vst [vmem:[%s4] sm:$0xff] %v187
  %v190 = vmul.f32 %v28, %v28
  %v191 = vmul.f32 %v29, %v29
  %v194 = vcombine.high %v190, %v190
  %v196 = vunpack.c.l.s4 1983009808
  %v197 = vunpack.c.0.s8 %v196
  %v198 = vlaneseq
  %v199 = vshrl.u32 %v198, 7
  %v200 = vsub.s32 %v197, %v199
  %v201 = vrot.slane %v190, %v200
  %v203 = vunpack.c.l.s4 1983009808
  %v204 = vunpack.c.0.s8 %v203
  %v205 = vlaneseq
  %v206 = vshrl.u32 %v205, 7
  %v207 = vsub.s32 %v204, %v206
  %v208 = vrot.slane %v194, %v207
  %v209 = vcombine.high %v201, %v201
  %v210 = vcombine.high %v208, %v208
  %v211 = vcombine.high %v191, %v191
  %v213 = vunpack.c.l.s4 1983009808
  %v214 = vunpack.c.0.s8 %v213
  %v215 = vlaneseq
  %v216 = vshrl.u32 %v215, 7
  %v217 = vsub.s32 %v214, %v216
  %v218 = vrot.slane %v191, %v217
  %v220 = vunpack.c.l.s4 1983009808
  %v221 = vunpack.c.0.s8 %v220
  %v222 = vlaneseq
  %v223 = vshrl.u32 %v222, 7
  %v224 = vsub.s32 %v221, %v223
  %v225 = vrot.slane %v211, %v224
  %v226 = vcombine.high %v218, %v218
  %v227 = vcombine.high %v225, %v225
  %v236 = vsel %vm74, %v201, 0.0
  %v237 = vrot.slane %v236, 4
  %v238 = vadd.f32 %v236, %v237
  %v239 = vrot.slane %v238, 2
  %v240 = vadd.f32 %v238, %v239
  %v241 = vrot.slane %v240, 1
  %v242 = vadd.f32 %v240, %v241
  %v243 = vsel %vm74, %v209, 0.0
  %v244 = vrot.slane %v243, 4
  %v245 = vadd.f32 %v243, %v244
  %v246 = vrot.slane %v245, 2
  %v247 = vadd.f32 %v245, %v246
  %v248 = vrot.slane %v247, 1
  %v249 = vadd.f32 %v247, %v248
  %v250 = vsel %vm74, %v208, 0.0
  %v251 = vrot.slane %v250, 4
  %v252 = vadd.f32 %v250, %v251
  %v253 = vrot.slane %v252, 2
  %v254 = vadd.f32 %v252, %v253
  %v255 = vrot.slane %v254, 1
  %v256 = vadd.f32 %v254, %v255
  %v257 = vsel %vm74, %v210, 0.0
  %v258 = vrot.slane %v257, 4
  %v259 = vadd.f32 %v257, %v258
  %v260 = vrot.slane %v259, 2
  %v261 = vadd.f32 %v259, %v260
  %v262 = vrot.slane %v261, 1
  %v263 = vadd.f32 %v261, %v262
  %v264 = vsel %vm74, %v218, 0.0
  %v265 = vrot.slane %v264, 4
  %v266 = vadd.f32 %v264, %v265
  %v267 = vrot.slane %v266, 2
  %v268 = vadd.f32 %v266, %v267
  %v269 = vrot.slane %v268, 1
  %v270 = vadd.f32 %v268, %v269
  %v271 = vsel %vm74, %v226, 0.0
  %v272 = vrot.slane %v271, 4
  %v273 = vadd.f32 %v271, %v272
  %v274 = vrot.slane %v273, 2
  %v275 = vadd.f32 %v273, %v274
  %v276 = vrot.slane %v275, 1
  %v277 = vadd.f32 %v275, %v276
  %v278 = vsel %vm74, %v225, 0.0
  %v279 = vrot.slane %v278, 4
  %v280 = vadd.f32 %v278, %v279
  %v281 = vrot.slane %v280, 2
  %v282 = vadd.f32 %v280, %v281
  %v283 = vrot.slane %v282, 1
  %v284 = vadd.f32 %v282, %v283
  %v285 = vsel %vm74, %v227, 0.0
  %v286 = vrot.slane %v285, 4
  %v287 = vadd.f32 %v285, %v286
  %v288 = vrot.slane %v287, 2
  %v289 = vadd.f32 %v287, %v288
  %v290 = vrot.slane %v289, 1
  %v291 = vadd.f32 %v289, %v290
  %v300 = vcombine.low %v242, %v249
  %v301 = vcombine.low %v256, %v263
  %v302 = vcombine.low %v270, %v277
  %v303 = vcombine.low %v284, %v291
  %v305 = vunpack.c.l.s4 1966171168
  %v306 = vunpack.c.0.s8 %v305
  %v307 = vlaneseq
  %v308 = vshrl.u32 %v307, 7
  %v309 = vsub.s32 %v306, %v308
  %v310 = vrot.slane %v300, %v309
  %v312 = vunpack.c.l.s4 1966171168
  %v313 = vunpack.c.0.s8 %v312
  %v314 = vlaneseq
  %v315 = vshrl.u32 %v314, 7
  %v316 = vsub.s32 %v313, %v315
  %v317 = vrot.slane %v301, %v316
  %v319 = vunpack.c.l.s4 1966171168
  %v320 = vunpack.c.0.s8 %v319
  %v321 = vlaneseq
  %v322 = vshrl.u32 %v321, 7
  %v323 = vsub.s32 %v320, %v322
  %v324 = vrot.slane %v302, %v323
  %v326 = vunpack.c.l.s4 1966171168
  %v327 = vunpack.c.0.s8 %v326
  %v328 = vlaneseq
  %v329 = vshrl.u32 %v328, 7
  %v330 = vsub.s32 %v327, %v329
  %v331 = vrot.slane %v303, %v330
  %v332 = vcombine.low %v310, %v317
  %v333 = vcombine.low %v324, %v331
  %v335 = vunpack.c.l.s4 1966171168
  %v336 = vunpack.c.0.s8 %v335
  %v337 = vlaneseq
  %v338 = vshrl.u32 %v337, 7
  %v339 = vsub.s32 %v336, %v338
  %v340 = vrot.slane %v332, %v339
  %v342 = vunpack.c.l.s4 1966171168
  %v343 = vunpack.c.0.s8 %v342
  %v344 = vlaneseq
  %v345 = vshrl.u32 %v344, 7
  %v346 = vsub.s32 %v343, %v345
  %v347 = vrot.slane %v333, %v346
  %v348 = vcombine.low %v340, %v347
  %350 = vst [vmem:[%s5] sm:$0xff] %v348
  // Predicated region
  $region14: #{_advnoise_add_std.1} parent=0 // pred_check
    _
  $region15: #{_advnoise_add_std.1} parent=0 // pred_check_branch
    %352 = sbr.rel (0) target = $region17
  $region16: #{_advnoise_add_std.1} parent=0 // pred_region
    _
  $region17: #{_advnoise_add_std.1} parent=0 // pred_fallthru
    _
  // Predicated region
  $region18: #{_advnoise_add_std.1} parent=0 // pred_check
    _
  $region19: #{_advnoise_add_std.1} parent=0 // pred_check_branch
    %354 = sbr.rel (0) target = $region21
  $region20: #{_advnoise_add_std.1} parent=0 // pred_region
    _
  $region21: #{_advnoise_add_std.1} parent=0 // pred_fallthru
    _
  // Predicated region
  $region22: #{_advnoise_add_std.1} parent=0 // pred_check
    _
  $region23: #{_advnoise_add_std.1} parent=0 // pred_check_branch
    %356 = sbr.rel (0) target = $region25
  $region24: #{_advnoise_add_std.1} parent=0 // pred_region
    _
  $region25: #{_advnoise_add_std.1} parent=0 // pred_fallthru
    _
  // Predicated region
  $region26: #{_advnoise_add_std.1} parent=0 // pred_check
    _
  $region27: #{_advnoise_add_std.1} parent=0 // pred_check_branch
    %358 = sbr.rel (0) target = $region29
  $region28: #{_advnoise_add_std.1} parent=0 // pred_region
    _
  $region29: #{_advnoise_add_std.1} parent=0 // pred_fallthru
    _
  // Predicated region
  $region30: #{_advnoise_add_std.1} parent=0 // pred_check
    _
  $region31: #{_advnoise_add_std.1} parent=0 // pred_check_branch
    %360 = sbr.rel (0) target = $region33
  $region32: #{_advnoise_add_std.1} parent=0 // pred_region
    _
  $region33: #{_advnoise_add_std.1} parent=0 // pred_fallthru
    _
  // Predicated region
  $region34: #{_advnoise_add_std.1} parent=0 // pred_check
    _
  $region35: #{_advnoise_add_std.1} parent=0 // pred_check_branch
    %362 = sbr.rel (0) target = $region37
  $region36: #{_advnoise_add_std.1} parent=0 // pred_region
    _
  $region37: #{_advnoise_add_std.1} parent=0 // pred_fallthru
    _

</llo_original>
